<compile_context>
chip_gen: v6e
topology: v6e:2x2x1
jax: 0.10.0
libtpu: 0.0.40
codegen_flags: <defaults>
</compile_context>

<pallas_src>
import functools

import jax
import jax.numpy as jnp
import numpy as np
from jax import lax
from jax.experimental import pallas as pl
from jax.experimental.pallas import tpu as pltpu


# --------------------------- generation-aware VMEM --------------------------- #

@functools.lru_cache(maxsize=None)
def _vmem_limit_bytes():
    """Scoped-VMEM cap: ~75% of physical per-core VMEM (48 MiB v7x, 96 MiB v5e/v6e)."""
    cap = 64 * 1024 * 1024  # v7x-safe default if the query is unavailable
    try:
        info = pltpu.get_tpu_info()
        cap = int(getattr(info, "vmem_capacity_bytes", cap) or cap)
    except Exception:
        pass
    return max(32 * 1024 * 1024, (cap * 3) // 4)


# ------------------------------ Pallas kernels ------------------------------ #

def _fc_gate(mean, w1t, b1, w2, b2):
    """fc1 -> ReLU -> fc2 -> sigmoid on the VPU (no MXU, no in-kernel transpose).

    mean: (C, 1); w1t: (C, Cr); b1: (1, Cr); w2: (C, Cr); b2: (C, 1) -> (C, 1).
    """
    h = jnp.sum(w1t * mean, axis=0, keepdims=True) + b1      # (1, Cr)
    h = jnp.maximum(h, 0.0)
    g = jnp.sum(w2 * h, axis=1, keepdims=True) + b2          # (C, 1)
    return jax.nn.sigmoid(g)


def _se_fused_kernel(x_ref, w1t_ref, b1_ref, w2_ref, b2_ref, o_ref, *, inv_dhw):
    """One batch element fully resident: squeeze + excitation + apply.

    x_ref/o_ref: (C, DHW); weights as in _fc_gate.
    """
    mean = jnp.sum(x_ref[...], axis=1, keepdims=True) * inv_dhw           # (C, 1)
    gate = _fc_gate(mean, w1t_ref[...], b1_ref[...], w2_ref[...], b2_ref[...])
    o_ref[...] = x_ref[...] * gate


def _se_gate_kernel(x_ref, w1t_ref, b1_ref, w2_ref, b2_ref, gate_ref, acc_ref,
                    *, inv_dhw, dhw, tile):
    """Streaming squeeze over spatial tiles + excitation FCs at the last tile.

    x_ref:    (C, tile)  one spatial tile of one batch element (lane-dense)
    gate_ref: (C, 1)     per-channel sigmoid gate (written at last tile)
    acc_ref:  (C, 1) f32 VMEM scratch: running per-channel sum over DHW
    """
    t = pl.program_id(1)

    @pl.when(t == 0)
    def _():
        acc_ref[...] = jnp.zeros_like(acc_ref)

    x = x_ref[...]
    if dhw % tile:  # static: masking code only emitted when a partial tile exists
        col = lax.broadcasted_iota(jnp.int32, x.shape, 1) + t * tile
        x = jnp.where(col < dhw, x, 0.0)
    acc_ref[...] += jnp.sum(x, axis=1, keepdims=True)

    @pl.when(t == pl.num_programs(1) - 1)
    def _():
        mean = acc_ref[...] * inv_dhw
        gate_ref[...] = _fc_gate(mean, w1t_ref[...], b1_ref[...],
                                 w2_ref[...], b2_ref[...])


def _se_apply_kernel(x_ref, gate_ref, o_ref):
    """out = x * gate (channel-wise).  x/o: (C, tile), gate: (C, 1)."""
    o_ref[...] = x_ref[...] * gate_ref[...]


# ------------------------------ pallas_call glue ---------------------------- #

def _se_fused_call(xf, w1t, b1, w2, b2, vmem_limit):
    N, C, DHW = xf.shape
    Cr = w1t.shape[1]
    return pl.pallas_call(
        functools.partial(_se_fused_kernel, inv_dhw=1.0 / DHW),
        out_shape=jax.ShapeDtypeStruct((N, C, DHW), jnp.float32),
        grid=(N,),
        in_specs=[
            pl.BlockSpec((None, C, DHW), lambda n: (n, 0, 0)),
            pl.BlockSpec((C, Cr), lambda n: (0, 0)),
            pl.BlockSpec((1, Cr), lambda n: (0, 0)),
            pl.BlockSpec((C, Cr), lambda n: (0, 0)),
            pl.BlockSpec((C, 1), lambda n: (0, 0)),
        ],
        out_specs=pl.BlockSpec((None, C, DHW), lambda n: (n, 0, 0)),
        compiler_params=pltpu.CompilerParams(
            dimension_semantics=("parallel",),
            vmem_limit_bytes=vmem_limit),
    )(xf, w1t, b1, w2, b2)


def _se_gate_call(xf, w1t, b1, w2, b2, tile, vmem_limit):
    N, C, DHW = xf.shape
    Cr = w1t.shape[1]
    num_tiles = (DHW + tile - 1) // tile
    kernel = functools.partial(_se_gate_kernel, inv_dhw=1.0 / DHW, dhw=DHW,
                               tile=tile)
    return pl.pallas_call(
        kernel,
        out_shape=jax.ShapeDtypeStruct((N, C, 1), jnp.float32),
        grid=(N, num_tiles),
        in_specs=[
            pl.BlockSpec((None, C, tile), lambda n, t: (n, 0, t)),
            pl.BlockSpec((C, Cr), lambda n, t: (0, 0)),
            pl.BlockSpec((1, Cr), lambda n, t: (0, 0)),
            pl.BlockSpec((C, Cr), lambda n, t: (0, 0)),
            pl.BlockSpec((C, 1), lambda n, t: (0, 0)),
        ],
        out_specs=pl.BlockSpec((None, C, 1), lambda n, t: (n, 0, 0)),
        scratch_shapes=[pltpu.VMEM((C, 1), jnp.float32)],
        compiler_params=pltpu.CompilerParams(
            dimension_semantics=("parallel", "arbitrary"),
            vmem_limit_bytes=vmem_limit),
    )(xf, w1t, b1, w2, b2)


def _se_apply_call(xf, gate, tile, vmem_limit):
    N, C, DHW = xf.shape
    num_tiles = (DHW + tile - 1) // tile
    return pl.pallas_call(
        _se_apply_kernel,
        out_shape=jax.ShapeDtypeStruct((N, C, DHW), jnp.float32),
        grid=(N, num_tiles),
        in_specs=[
            pl.BlockSpec((None, C, tile), lambda n, t: (n, 0, t)),
            pl.BlockSpec((None, C, 1), lambda n, t: (n, 0, 0)),
        ],
        out_specs=pl.BlockSpec((None, C, tile), lambda n, t: (n, 0, t)),
        compiler_params=pltpu.CompilerParams(
            dimension_semantics=("parallel", "parallel"),
            vmem_limit_bytes=vmem_limit),
    )(xf, gate)


def _pick_tile_dhw(dhw, c, itemsize, vmem_limit):
    """Byte-budget tile size for the two-pass path (lane dim, multiple of 128)."""
    # ~2-8 MiB per block; the apply pass keeps ~4 blocks (2 in + 2 out) live.
    target_block_bytes = min(8 << 20, max(2 << 20, vmem_limit // 8))
    max_tile = max(512, target_block_bytes // (c * itemsize))
    max_tile = (max_tile // 128) * 128
    if dhw <= max_tile:
        return dhw                      # full-extent lane block (always legal)
    best = 0
    t = 128
    while t <= max_tile:                # largest 128-multiple divisor in budget
        if dhw % t == 0:
            best = t
        t += 128
    if best:
        return best
    return max_tile                     # no divisor: cdiv grid + masked last tile


# ------------------------------ module wrapper ------------------------------ #

def init_params(key, num_channels, reduction_ratio=2):
    cr = num_channels // reduction_ratio
    k1, k2, k3, k4 = jax.random.split(key, 4)
    return {
        # PyTorch Linear layout: (out_features, in_features)
        "fc1_w": jax.random.normal(k1, (cr, num_channels), jnp.float32)
                 / jnp.sqrt(1.0 * num_channels),
        "fc1_b": 0.1 * jax.random.normal(k2, (cr,), jnp.float32),
        "fc2_w": jax.random.normal(k3, (num_channels, cr), jnp.float32)
                 / jnp.sqrt(1.0 * cr),
        "fc2_b": 0.1 * jax.random.normal(k4, (num_channels,), jnp.float32),
    }


@functools.partial(jax.jit, static_argnames=("force_two_pass", "tile_override"))
def se_block_forward(x_ncdhw, params, force_two_pass=False, tile_override=None):
    """SE_Block forward.  Input/output: (N, C, D, H, W), PyTorch convention."""
    N, C, D, H, W = x_ncdhw.shape
    DHW = D * H * W
    itemsize = 4

    xf = x_ncdhw.reshape(N, C, DHW).astype(jnp.float32)   # pure view, no transpose
    # fc1 weight pre-transposed so the in-kernel FC chain needs no relayout.
    w1t = params["fc1_w"].astype(jnp.float32).T                     # (C, Cr)
    b1 = params["fc1_b"].astype(jnp.float32).reshape(1, -1)         # (1, Cr)
    w2 = params["fc2_w"].astype(jnp.float32)                        # (C, Cr)
    b2 = params["fc2_b"].astype(jnp.float32).reshape(-1, 1)         # (C, 1)

    vmem_limit = _vmem_limit_bytes()
    slab_bytes = C * DHW * itemsize
    fused_ok = (not force_two_pass) and (4 * slab_bytes + (2 << 20) <= vmem_limit)

    if fused_ok:
        out = _se_fused_call(xf, w1t, b1, w2, b2, vmem_limit)
    else:
        tile = (tile_override if tile_override is not None
                else _pick_tile_dhw(DHW, C, itemsize, vmem_limit))
        gate = _se_gate_call(xf, w1t, b1, w2, b2, tile, vmem_limit)   # (N, C, 1)
        out = _se_apply_call(xf, gate, tile, vmem_limit)              # (N, C, DHW)

    return out.reshape(N, C, D, H, W)


# ------------------------------ pure-JAX reference --------------------------- #

def _se_block_ref(x, params):
    N, C = x.shape[0], x.shape[1]
    s = x.reshape(N, C, -1).mean(axis=-1)                              # (N, C)
    h = jnp.maximum(s @ params["fc1_w"].T + params["fc1_b"], 0.0)      # (N, Cr)
    g = jax.nn.sigmoid(h @ params["fc2_w"].T + params["fc2_b"])        # (N, C)
    return x * g.reshape(N, C, 1, 1, 1)


# ----------------------------------- main ----------------------------------- #

if __name__ == "__main__":
    kx, kp, kx2, kp2 = jax.random.split(jax.random.PRNGKey(0), 4)

    def check(x, params, **kw):
        out = jax.block_until_ready(se_block_forward(x, params, **kw))
        ref = _se_block_ref(x, params)
        assert out.shape == x.shape, (out.shape, x.shape)
        assert bool(jnp.all(jnp.isfinite(out)))
        np.testing.assert_allclose(np.asarray(out), np.asarray(ref),
                                   rtol=1e-5, atol=1e-5)

    # Primary: fused single-pass path (1 read + 1 write of x, grid=(N,)).
    N, C, D, H, W = 2, 8, 16, 16, 16
    x = jax.random.normal(kx, (N, C, D, H, W), jnp.float32)
    params = init_params(kp, C, reduction_ratio=2)
    check(x, params)

    # Fallback streaming two-pass path (forced, 512-lane tiles, 8 tiles/element).
    check(x, params, force_two_pass=True, tile_override=512)

    # Odd spatial size (DHW = 210, not a 128 multiple) through the fused path.
    x2 = jax.random.normal(kx2, (1, 4, 5, 6, 7), jnp.float32)
    params2 = init_params(kp2, 4, reduction_ratio=2)
    check(x2, params2)

    # Odd spatial size through the two-pass path: exercises the masked partial tile.
    check(x2, params2, force_two_pass=True, tile_override=128)

    print("KERNEL_OK")
</pallas_src>

<mosaic_0001>
module attributes {stable_mosaic.version = 11 : i64} {
  func.func @_se_fused_kernel(%arg0: i32, %arg1: memref<1x8x4096xf32, #tpu.memory_space<vmem>>, %arg2: memref<8x4xf32, #tpu.memory_space<vmem>>, %arg3: memref<1x4xf32, #tpu.memory_space<vmem>>, %arg4: memref<8x4xf32, #tpu.memory_space<vmem>>, %arg5: memref<8x1xf32, #tpu.memory_space<vmem>>, %arg6: memref<1x8x4096xf32, #tpu.memory_space<vmem>>) attributes {dimension_semantics = [#tpu.dimension_semantics<parallel>], iteration_bounds = array<i64: 2>, scalar_prefetch = 0 : i64, scratch_operands = 0 : i64, tpu.core_type = #tpu.core_type<tc>, window_params = [{transform_indices = @transform_0, window_bounds = array<i64: 1, 8, 4096>}, {pipeline_mode = #tpu.pipeline_mode<synchronous>, transform_indices = @transform_1, window_bounds = array<i64: 8, 4>}, {pipeline_mode = #tpu.pipeline_mode<synchronous>, transform_indices = @transform_2, window_bounds = array<i64: 1, 4>}, {pipeline_mode = #tpu.pipeline_mode<synchronous>, transform_indices = @transform_3, window_bounds = array<i64: 8, 4>}, {pipeline_mode = #tpu.pipeline_mode<synchronous>, transform_indices = @transform_4, window_bounds = array<i64: 8, 1>}, {transform_indices = @transform_5, window_bounds = array<i64: 1, 8, 4096>}]} {
    %c0 = arith.constant 0 : index
    %c0_0 = arith.constant 0 : index
    %c0_1 = arith.constant 0 : index
    %0 = vector.load %arg1[%c0, %c0_0, %c0_1] : memref<1x8x4096xf32, #tpu.memory_space<vmem>>, vector<1x8x4096xf32>
    %1 = vector.shape_cast %0 : vector<1x8x4096xf32> to vector<8x4096xf32>
    %cst = arith.constant dense<0.000000e+00> : vector<8xf32>
    %2 = vector.multi_reduction <add>, %1, %cst [1] : vector<8x4096xf32> to vector<8xf32>
    %3 = vector.shape_cast %2 : vector<8xf32> to vector<8x1xf32>
    %cst_2 = arith.constant 2.44140625E-4 : f32
    %4 = vector.broadcast %cst_2 : f32 to vector<8x1xf32>
    %5 = arith.mulf %3, %4 : vector<8x1xf32>
    %c0_3 = arith.constant 0 : index
    %c0_4 = arith.constant 0 : index
    %6 = vector.load %arg2[%c0_3, %c0_4] : memref<8x4xf32, #tpu.memory_space<vmem>>, vector<8x4xf32>
    %c0_5 = arith.constant 0 : index
    %c0_6 = arith.constant 0 : index
    %7 = vector.load %arg3[%c0_5, %c0_6] : memref<1x4xf32, #tpu.memory_space<vmem>>, vector<1x4xf32>
    %c0_7 = arith.constant 0 : index
    %c0_8 = arith.constant 0 : index
    %8 = vector.load %arg4[%c0_7, %c0_8] : memref<8x4xf32, #tpu.memory_space<vmem>>, vector<8x4xf32>
    %c0_9 = arith.constant 0 : index
    %c0_10 = arith.constant 0 : index
    %9 = vector.load %arg5[%c0_9, %c0_10] : memref<8x1xf32, #tpu.memory_space<vmem>>, vector<8x1xf32>
    %10 = vector.broadcast %5 : vector<8x1xf32> to vector<8x4xf32>
    %11 = arith.mulf %6, %10 : vector<8x4xf32>
    %cst_11 = arith.constant dense<0.000000e+00> : vector<4xf32>
    %12 = vector.multi_reduction <add>, %11, %cst_11 [0] : vector<8x4xf32> to vector<4xf32>
    %13 = vector.shape_cast %12 : vector<4xf32> to vector<1x4xf32>
    %14 = arith.addf %13, %7 : vector<1x4xf32>
    %cst_12 = arith.constant 0.000000e+00 : f32
    %15 = vector.broadcast %cst_12 : f32 to vector<1x4xf32>
    %16 = arith.maximumf %14, %15 : vector<1x4xf32>
    %17 = vector.broadcast %16 : vector<1x4xf32> to vector<8x4xf32>
    %18 = arith.mulf %8, %17 : vector<8x4xf32>
    %cst_13 = arith.constant dense<0.000000e+00> : vector<8xf32>
    %19 = vector.multi_reduction <add>, %18, %cst_13 [1] : vector<8x4xf32> to vector<8xf32>
    %20 = vector.shape_cast %19 : vector<8xf32> to vector<8x1xf32>
    %21 = arith.addf %20, %9 : vector<8x1xf32>
    %22 = arith.negf %21 : vector<8x1xf32>
    %23 = math.exp %22 : vector<8x1xf32>
    %cst_14 = arith.constant 1.000000e+00 : f32
    %24 = vector.broadcast %cst_14 : f32 to vector<8x1xf32>
    %25 = arith.addf %24, %23 : vector<8x1xf32>
    %26 = arith.divf %24, %25 : vector<8x1xf32>
    %c0_15 = arith.constant 0 : index
    %c0_16 = arith.constant 0 : index
    %c0_17 = arith.constant 0 : index
    %27 = vector.load %arg1[%c0_15, %c0_16, %c0_17] : memref<1x8x4096xf32, #tpu.memory_space<vmem>>, vector<1x8x4096xf32>
    %28 = vector.shape_cast %27 : vector<1x8x4096xf32> to vector<8x4096xf32>
    %29 = vector.broadcast %26 : vector<8x1xf32> to vector<8x4096xf32>
    %30 = arith.mulf %28, %29 : vector<8x4096xf32>
    %c0_18 = arith.constant 0 : index
    %c0_19 = arith.constant 0 : index
    %c0_20 = arith.constant 0 : index
    %31 = vector.load %arg6[%c0_18, %c0_19, %c0_20] : memref<1x8x4096xf32, #tpu.memory_space<vmem>>, vector<1x8x4096xf32>
    %32 = vector.shape_cast %31 : vector<1x8x4096xf32> to vector<8x4096xf32>
    %33 = vector.shape_cast %30 : vector<8x4096xf32> to vector<1x8x4096xf32>
    tpu.vector_store %arg6[%c0_18, %c0_19, %c0_20], %33 {strides = array<i32>} : memref<1x8x4096xf32, #tpu.memory_space<vmem>>, vector<1x8x4096xf32>,
    return
  }
  func.func @transform_0(%arg0: i32) -> (i32, i32, i32) {
    %c0_i32 = arith.constant 0 : i32
    %c0_i32_0 = arith.constant 0 : i32
    %c0_i32_1 = arith.constant 0 : i32
    return %arg0, %c0_i32, %c0_i32_0 : i32, i32, i32
  }
  func.func @transform_1(%arg0: i32) -> (i32, i32) {
    %c0_i32 = arith.constant 0 : i32
    %c0_i32_0 = arith.constant 0 : i32
    %c0_i32_1 = arith.constant 0 : i32
    return %c0_i32, %c0_i32_0 : i32, i32
  }
  func.func @transform_2(%arg0: i32) -> (i32, i32) {
    %c0_i32 = arith.constant 0 : i32
    %c0_i32_0 = arith.constant 0 : i32
    %c0_i32_1 = arith.constant 0 : i32
    return %c0_i32, %c0_i32_0 : i32, i32
  }
  func.func @transform_3(%arg0: i32) -> (i32, i32) {
    %c0_i32 = arith.constant 0 : i32
    %c0_i32_0 = arith.constant 0 : i32
    %c0_i32_1 = arith.constant 0 : i32
    return %c0_i32, %c0_i32_0 : i32, i32
  }
  func.func @transform_4(%arg0: i32) -> (i32, i32) {
    %c0_i32 = arith.constant 0 : i32
    %c0_i32_0 = arith.constant 0 : i32
    %c0_i32_1 = arith.constant 0 : i32
    return %c0_i32, %c0_i32_0 : i32, i32
  }
  func.func @transform_5(%arg0: i32) -> (i32, i32, i32) {
    %c0_i32 = arith.constant 0 : i32
    %c0_i32_0 = arith.constant 0 : i32
    %c0_i32_1 = arith.constant 0 : i32
    return %arg0, %c0_i32, %c0_i32_0 : i32, i32, i32
  }
}

</mosaic_0001>

<llo_original>
// kernel: se_block_forward.1
$region0: #{se_block_forward.1}
  #allocation0 [shape = 'u32[]', space=smem, size = 0x4, offset = 0x4, fixed_abs, tag = 'smem constant byte address 0x4 - core index']
  #allocation1 [shape = 'u32[144,128]{1,0:T(1,128)}', space=vmem, size = 0x12000, scoped, tag = 'internal scratch']
  %s0 = inlined_call_operand.vmem [shape: f32[2,8,4096], index: 0, kind: input, shape index: {}]
  %s1 = inlined_call_operand.vmem [shape: f32[8,4], index: 1, kind: input, shape index: {}]
  %s2 = inlined_call_operand.vmem [shape: f32[1,4], index: 2, kind: input, shape index: {}]
  %s3 = inlined_call_operand.vmem [shape: f32[8,4], index: 3, kind: input, shape index: {}]
  %s4 = inlined_call_operand.vmem [shape: f32[8,1], index: 4, kind: input, shape index: {}]
  %s5 = inlined_call_operand.vmem [shape: f32[2,8,4096], index: 5, kind: output, shape index: {}]
  %s6 = sld [smem:[#allocation0]]
  $region53: #{se_block_forward.1} parent=0
    _
  %s8 = ssub.s32 1, %s6
  %s9 = scalar_select 0, %s8, %s6
  loop: start=0, step=1, limit=4
  $region2: #{se_block_forward.1} parent=0 // loop_pre_header
    _
  $region3: #{se_block_forward.1} parent=0 // loop_header
    %s11 = sphi 0, %s15
    %p12 = scmp.ge.s32.totalorder %s11, 4
    %s21 = sphi 0, %s23
    %s24 = sphi 0, %s21
    %s25 = sphi 0, %s24
    %s41 = sphi 0, %s25
    %s45 = sphi 0, %s45
    %s47 = sphi 0, %s45
    %s48 = sphi 0, %s47
    %s62 = sphi 0, %s48
    %s66 = sphi 0, %s66
    %s68 = sphi 0, %s66
    %s69 = sphi 0, %s68
    %s83 = sphi 0, %s69
    %s87 = sphi 0, %s87
    %s89 = sphi 0, %s87
    %s90 = sphi 0, %s89
    %s104 = sphi 0, %s90
    %s108 = sphi 0, %s108
    %s110 = sphi 0, %s108
    %s111 = sphi 0, %s110
    %s125 = sphi 0, %s111
    %s131 = sphi 0, %s133
    %s134 = sphi 0, %s131
    %s135 = sphi 0, %s134
    %s151 = sphi 0, %s135
  $region4: #{se_block_forward.1} parent=0 // loop_header_branch
    %14 = sbr.rel (%p12) target = $region8
  $region5: #{se_block_forward.1} parent=0 // loop_body
    %s16 = ssub.s32 %s11, 1
    %s17 = ssub.s32 %s11, 2
    %s18 = sadd.s32 %s11, 1
    %s19 = ssub.s32 %s11, %s18
    %p20 = scmp.eq.s32.totalorder %s19, 0
    %s22 = sadd.s32 %s21, 1
    %s23 = scalar_select %p20, %s21, %s22
    %p26 = pneg %p20
    %p27 = scmp.eq.s32.totalorder %s11, 1
    %p28 = por %p26, %p27
    %p29 = scmp.ne.s32.totalorder %s21, %s24
    %p30 = scmp.eq.s32.totalorder %s11, 0
    %p31 = por %p29, %p30
    %p32 = scmp.ne.s32.totalorder %s21, %s24
    %p33 = scmp.eq.s32.totalorder %s16, 1
    %p34 = por %p32, %p33
    %p35 = scmp.ne.s32.totalorder %s24, %s25
    %p36 = scmp.eq.s32.totalorder %s16, 0
    %p37 = por %p35, %p36
    %p38 = scmp.ne.s32.totalorder %s24, %s25
    %p39 = scmp.eq.s32.totalorder %s17, 1
    %p40 = por %p38, %p39
    %p42 = scmp.ne.s32.totalorder %s25, %s41
    %p43 = scmp.eq.s32.totalorder %s17, 0
    %p44 = por %p42, %p43
    %s46 = sadd.s32 %s45, 1
    %p49 = scmp.eq.s32.totalorder %s11, 1
    %p50 = scmp.ne.s32.totalorder %s45, %s47
    %p51 = scmp.eq.s32.totalorder %s11, 0
    %p52 = por %p50, %p51
    %p53 = scmp.ne.s32.totalorder %s45, %s47
    %p54 = scmp.eq.s32.totalorder %s16, 1
    %p55 = por %p53, %p54
    %p56 = scmp.ne.s32.totalorder %s47, %s48
    %p57 = scmp.eq.s32.totalorder %s16, 0
    %p58 = por %p56, %p57
    %p59 = scmp.ne.s32.totalorder %s47, %s48
    %p60 = scmp.eq.s32.totalorder %s17, 1
    %p61 = por %p59, %p60
    %p63 = scmp.ne.s32.totalorder %s48, %s62
    %p64 = scmp.eq.s32.totalorder %s17, 0
    %p65 = por %p63, %p64
    %s67 = sadd.s32 %s66, 1
    %p70 = scmp.eq.s32.totalorder %s11, 1
    %p71 = scmp.ne.s32.totalorder %s66, %s68
    %p72 = scmp.eq.s32.totalorder %s11, 0
    %p73 = por %p71, %p72
    %p74 = scmp.ne.s32.totalorder %s66, %s68
    %p75 = scmp.eq.s32.totalorder %s16, 1
    %p76 = por %p74, %p75
    %p77 = scmp.ne.s32.totalorder %s68, %s69
    %p78 = scmp.eq.s32.totalorder %s16, 0
    %p79 = por %p77, %p78
    %p80 = scmp.ne.s32.totalorder %s68, %s69
    %p81 = scmp.eq.s32.totalorder %s17, 1
    %p82 = por %p80, %p81
    %p84 = scmp.ne.s32.totalorder %s69, %s83
    %p85 = scmp.eq.s32.totalorder %s17, 0
    %p86 = por %p84, %p85
    %s88 = sadd.s32 %s87, 1
    %p91 = scmp.eq.s32.totalorder %s11, 1
    %p92 = scmp.ne.s32.totalorder %s87, %s89
    %p93 = scmp.eq.s32.totalorder %s11, 0
    %p94 = por %p92, %p93
    %p95 = scmp.ne.s32.totalorder %s87, %s89
    %p96 = scmp.eq.s32.totalorder %s16, 1
    %p97 = por %p95, %p96
    %p98 = scmp.ne.s32.totalorder %s89, %s90
    %p99 = scmp.eq.s32.totalorder %s16, 0
    %p100 = por %p98, %p99
    %p101 = scmp.ne.s32.totalorder %s89, %s90
    %p102 = scmp.eq.s32.totalorder %s17, 1
    %p103 = por %p101, %p102
    %p105 = scmp.ne.s32.totalorder %s90, %s104
    %p106 = scmp.eq.s32.totalorder %s17, 0
    %p107 = por %p105, %p106
    %s109 = sadd.s32 %s108, 1
    %p112 = scmp.eq.s32.totalorder %s11, 1
    %p113 = scmp.ne.s32.totalorder %s108, %s110
    %p114 = scmp.eq.s32.totalorder %s11, 0
    %p115 = por %p113, %p114
    %p116 = scmp.ne.s32.totalorder %s108, %s110
    %p117 = scmp.eq.s32.totalorder %s16, 1
    %p118 = por %p116, %p117
    %p119 = scmp.ne.s32.totalorder %s110, %s111
    %p120 = scmp.eq.s32.totalorder %s16, 0
    %p121 = por %p119, %p120
    %p122 = scmp.ne.s32.totalorder %s110, %s111
    %p123 = scmp.eq.s32.totalorder %s17, 1
    %p124 = por %p122, %p123
    %p126 = scmp.ne.s32.totalorder %s111, %s125
    %p127 = scmp.eq.s32.totalorder %s17, 0
    %p128 = por %p126, %p127
    %s129 = ssub.s32 %s11, %s18
    %p130 = scmp.eq.s32.totalorder %s129, 0
    %s132 = sadd.s32 %s131, 1
    %s133 = scalar_select %p130, %s131, %s132
    %p136 = pneg %p130
    %p137 = scmp.eq.s32.totalorder %s11, 1
    %p138 = por %p136, %p137
    %p139 = scmp.ne.s32.totalorder %s131, %s134
    %p140 = scmp.eq.s32.totalorder %s11, 0
    %p141 = por %p139, %p140
    %p142 = scmp.ne.s32.totalorder %s131, %s134
    %p143 = scmp.eq.s32.totalorder %s16, 1
    %p144 = por %p142, %p143
    %p145 = scmp.ne.s32.totalorder %s134, %s135
    %p146 = scmp.eq.s32.totalorder %s16, 0
    %p147 = por %p145, %p146
    %p148 = scmp.ne.s32.totalorder %s134, %s135
    %p149 = scmp.eq.s32.totalorder %s17, 1
    %p150 = por %p148, %p149
    %p152 = scmp.ne.s32.totalorder %s135, %s151
    %p153 = scmp.eq.s32.totalorder %s17, 0
    %p154 = por %p152, %p153
    %p155 = scmp.le.s32.totalorder 1, %s11
    %p156 = scmp.lt.s32.totalorder %s11, 3
    %p157 = pnand %p155, %p156
    %p158 = pneg %p157
    // Predicated region
    $region9: #{se_block_forward.1} parent=5 // pred_check
      _
    $region10: #{se_block_forward.1} parent=5 // pred_check_branch
      %160 = sbr.rel (%p157) target = $region12
    $region11: #{se_block_forward.1} parent=5 // pred_region
      %s161 = ssub.s32 %s11, 1
      // Predicated region
      $region13: #{se_block_forward.1} parent=11 // pred_check
        %p162 = pneg %p58
      $region14: #{se_block_forward.1} parent=11 // pred_check_branch
        %164 = sbr.rel (%p162) target = $region16
      $region15: #{se_block_forward.1} parent=11 // pred_region
        _
      $region16: #{se_block_forward.1} parent=11 // pred_fallthru
        _
      // Predicated region
      $region17: #{se_block_forward.1} parent=11 // pred_check
        %p165 = pneg %p79
      $region18: #{se_block_forward.1} parent=11 // pred_check_branch
        %167 = sbr.rel (%p165) target = $region20
      $region19: #{se_block_forward.1} parent=11 // pred_region
        _
      $region20: #{se_block_forward.1} parent=11 // pred_fallthru
        _
      // Predicated region
      $region21: #{se_block_forward.1} parent=11 // pred_check
        %p168 = pneg %p100
      $region22: #{se_block_forward.1} parent=11 // pred_check_branch
        %170 = sbr.rel (%p168) target = $region24
      $region23: #{se_block_forward.1} parent=11 // pred_region
        _
      $region24: #{se_block_forward.1} parent=11 // pred_fallthru
        _
      // Predicated region
      $region25: #{se_block_forward.1} parent=11 // pred_check
        %p171 = pneg %p121
      $region26: #{se_block_forward.1} parent=11 // pred_check_branch
        %173 = sbr.rel (%p171) target = $region28
      $region27: #{se_block_forward.1} parent=11 // pred_region
        _
      $region28: #{se_block_forward.1} parent=11 // pred_fallthru
        _
    $region12: #{se_block_forward.1} parent=5 // pred_fallthru
      _
    %p174 = scmp.lt.s32.totalorder %s11, 2
    // Predicated region
    $region29: #{se_block_forward.1} parent=5 // pred_check
      %p175 = pneg %p174
    $region30: #{se_block_forward.1} parent=5 // pred_check_branch
      %177 = sbr.rel (%p175) target = $region32
    $region31: #{se_block_forward.1} parent=5 // pred_region
      // Predicated region
      $region33: #{se_block_forward.1} parent=31 // pred_check
        %p178 = pneg %p31
      $region34: #{se_block_forward.1} parent=31 // pred_check_branch
        %180 = sbr.rel (%p178) target = $region36
      $region35: #{se_block_forward.1} parent=31 // pred_region
        %p181 = scmp.lt.s32.totalorder %s11, 1
        %s182 = scalar_select %p181, %s11, 1
        %s183 = smul.addr %s182, 32
        %s184 = smul.addr %s183, 8
        %s185 = scalar_lea.vmem %s0, %s184
      $region36: #{se_block_forward.1} parent=31 // pred_fallthru
        _
    $region32: #{se_block_forward.1} parent=5 // pred_fallthru
      _
    %p186 = scmp.le.s32.totalorder 1, %s11
    %p187 = scmp.lt.s32.totalorder %s11, 3
    %p188 = pnand %p186, %p187
    %p189 = pneg %p188
    // Predicated region
    $region37: #{se_block_forward.1} parent=5 // pred_check
      _
    $region38: #{se_block_forward.1} parent=5 // pred_check_branch
      %191 = sbr.rel (%p188) target = $region40
    $region39: #{se_block_forward.1} parent=5 // pred_region
      %s192 = ssub.s32 %s11, 1
      %p193 = scmp.lt.s32.totalorder %s16, 1
      %s194 = scalar_select %p193, %s16, 1
      %s195 = smul.addr %s194, 32
      %s196 = smul.addr %s195, 8
      %s197 = scalar_lea.vmem %s0, %s196
      %p198 = pneg %p37
      %p199 = pneg %p34
      %p200 = pneg %p58
      %p201 = pneg %p55
      %p202 = pneg %p79
      %p203 = pneg %p76
      %p204 = pneg %p100
      %p205 = pneg %p97
      %p206 = pneg %p121
      %p207 = pneg %p118
      %p208 = pneg %p147
      %p209 = pneg %p144
      %p210 = scmp.lt.s32.totalorder %s16, 1
      %s211 = scalar_select %p210, %s16, 1
      %s212 = smul.addr %s211, 32
      %s213 = smul.addr %s212, 8
      %s214 = scalar_lea.vmem %s5, %s213
      %p215 = scmp.lt.s32.totalorder %s16, 1
      %s216 = scalar_select %p215, %s16, 1
      %s217 = smul.addr %s216, 32
      %s218 = smul.addr %s217, 8
      %s219 = scalar_lea.vmem %s0, %s218
      %p220 = scmp.lt.s32.totalorder %s16, 1
      %s221 = scalar_select %p220, %s16, 1
      %s222 = smul.addr %s221, 32
      %s223 = smul.addr %s222, 8
      %s224 = scalar_lea.vmem %s5, %s223
      %v225 = vld [vmem:[%s219] sm:$0xff]
      %v226 = vld [vmem:[%s219 + $0x8] sm:$0xff]
      %v227 = vld [vmem:[%s219 + $0x10] sm:$0xff]
      %v228 = vld [vmem:[%s219 + $0x18] sm:$0xff]
      %v229 = vld [vmem:[%s219 + $0x20] sm:$0xff]
      %v230 = vld [vmem:[%s219 + $0x28] sm:$0xff]
      %v231 = vld [vmem:[%s219 + $0x30] sm:$0xff]
      %v232 = vld [vmem:[%s219 + $0x38] sm:$0xff]
      %v233 = vld [vmem:[%s219 + $0x40] sm:$0xff]
      %v234 = vld [vmem:[%s219 + $0x48] sm:$0xff]
      %v235 = vld [vmem:[%s219 + $0x50] sm:$0xff]
      %v236 = vld [vmem:[%s219 + $0x58] sm:$0xff]
      %v237 = vld [vmem:[%s219 + $0x60] sm:$0xff]
      %v238 = vld [vmem:[%s219 + $0x68] sm:$0xff]
      %v239 = vld [vmem:[%s219 + $0x70] sm:$0xff]
      %v240 = vld [vmem:[%s219 + $0x78] sm:$0xff]
      %v241 = vld [vmem:[%s219 + $0x80] sm:$0xff]
      %v242 = vld [vmem:[%s219 + $0x88] sm:$0xff]
      %v243 = vld [vmem:[%s219 + $0x90] sm:$0xff]
      %v244 = vld [vmem:[%s219 + $0x98] sm:$0xff]
      %v245 = vld [vmem:[%s219 + $0xa0] sm:$0xff]
      %v246 = vld [vmem:[%s219 + $0xa8] sm:$0xff]
      %v247 = vld [vmem:[%s219 + $0xb0] sm:$0xff]
      %v248 = vld [vmem:[%s219 + $0xb8] sm:$0xff]
      %v249 = vld [vmem:[%s219 + $0xc0] sm:$0xff]
      %v250 = vld [vmem:[%s219 + $0xc8] sm:$0xff]
      %v251 = vld [vmem:[%s219 + $0xd0] sm:$0xff]
      %v252 = vld [vmem:[%s219 + $0xd8] sm:$0xff]
      %v253 = vld [vmem:[%s219 + $0xe0] sm:$0xff]
      %v254 = vld [vmem:[%s219 + $0xe8] sm:$0xff]
      %v255 = vld [vmem:[%s219 + $0xf0] sm:$0xff]
      %v256 = vld [vmem:[%s219 + $0xf8] sm:$0xff]
      %v257 = vadd.f32 %v225, %v226
      %v258 = vadd.f32 %v257, %v227
      %v259 = vadd.f32 %v258, %v228
      %v260 = vadd.f32 %v259, %v229
      %v261 = vadd.f32 %v260, %v230
      %v262 = vadd.f32 %v261, %v231
      %v263 = vadd.f32 %v262, %v232
      %v264 = vadd.f32 %v263, %v233
      %v265 = vadd.f32 %v264, %v234
      %v266 = vadd.f32 %v265, %v235
      %v267 = vadd.f32 %v266, %v236
      %v268 = vadd.f32 %v267, %v237
      %v269 = vadd.f32 %v268, %v238
      %v270 = vadd.f32 %v269, %v239
      %v271 = vadd.f32 %v270, %v240
      %v272 = vadd.f32 %v271, %v241
      %v273 = vadd.f32 %v272, %v242
      %v274 = vadd.f32 %v273, %v243
      %v275 = vadd.f32 %v274, %v244
      %v276 = vadd.f32 %v275, %v245
      %v277 = vadd.f32 %v276, %v246
      %v278 = vadd.f32 %v277, %v247
      %v279 = vadd.f32 %v278, %v248
      %v280 = vadd.f32 %v279, %v249
      %v281 = vadd.f32 %v280, %v250
      %v282 = vadd.f32 %v281, %v251
      %v283 = vadd.f32 %v282, %v252
      %v284 = vadd.f32 %v283, %v253
      %v285 = vadd.f32 %v284, %v254
      %v286 = vadd.f32 %v285, %v255
      %v287 = vadd.f32 %v286, %v256
      %288 = vadd.xlane.f32.xlu0 %v287
      %v289 = vpop.xlane.xlu0 %288
      %v290 = vmul.f32 %v289, 0.00024414063
      %v291 = vld [vmem:[%s1] sm:$0xff]
      %v292 = vld [vmem:[%s2] sm:$0x1]
      %v293 = vld [vmem:[%s3] sm:$0xff]
      %v294 = vld [vmem:[%s4] sm:$0xff]
      %v295 = vmul.f32 %v291, %v290
      %vm296 = vcmask 31744
      %v297 = vsel %vm296, %v295, 0.0
      %v298 = vrot.slane %v297, 4
      %v299 = vadd.f32 %v297, %v298
      %v300 = vrot.slane %v299, 2
      %v301 = vadd.f32 %v299, %v300
      %v302 = vrot.slane %v301, 1
      %v303 = vadd.f32 %v301, %v302
      %v304 = vadd.f32 %v303, %v292
      %v305 = vmax.f32 %v304, 0.0
      %v306 = vlaneseq
      %v307 = vshrl.u32 %v306, 7
      %v308 = vsub.s32 0, %v307
      %v309 = vrot.slane %v305, %v308
      %v310 = vmul.f32 %v293, %v309
      %v311 = vsel %vm296, %v310, 0.0
      %312 = vadd.xlane.f32.xlu0 %v311
      %v313 = vpop.xlane.xlu0 %312
      %v314 = vadd.f32 %v313, %v294
      %v315 = vxor.u32 %v314, 2147483648
      %v316 = vmul.f32 %v315, 1.442695
      %v317 = vpow.pop %v316
      %v318 = vadd.f32 %v317, 1.0
      %v319 = vrcp.pop %v318
      %v320 = vmul.f32 1.0, %v319
      %322 = vset.pattern.permute.xlu0 0
      %323 = vperm.xlu0 %322, %v320
      %v324 = vpop.permute.xlu0 %323
      %v326 = vmul.f32 %v225, %v324
      %v327 = vmul.f32 %v226, %v324
      %v328 = vmul.f32 %v227, %v324
      %v329 = vmul.f32 %v228, %v324
      %v330 = vmul.f32 %v229, %v324
      %v331 = vmul.f32 %v230, %v324
      %v332 = vmul.f32 %v231, %v324
      %v333 = vmul.f32 %v232, %v324
      %v334 = vmul.f32 %v233, %v324
      %v335 = vmul.f32 %v234, %v324
      %v336 = vmul.f32 %v235, %v324
      %v337 = vmul.f32 %v236, %v324
      %v338 = vmul.f32 %v237, %v324
      %v339 = vmul.f32 %v238, %v324
      %v340 = vmul.f32 %v239, %v324
      %v341 = vmul.f32 %v240, %v324
      %v342 = vmul.f32 %v241, %v324
      %v343 = vmul.f32 %v242, %v324
      %v344 = vmul.f32 %v243, %v324
      %v345 = vmul.f32 %v244, %v324
      %v346 = vmul.f32 %v245, %v324
      %v347 = vmul.f32 %v246, %v324
      %v348 = vmul.f32 %v247, %v324
      %v349 = vmul.f32 %v248, %v324
      %v350 = vmul.f32 %v249, %v324
      %v351 = vmul.f32 %v250, %v324
      %v352 = vmul.f32 %v251, %v324
      %v353 = vmul.f32 %v252, %v324
      %v354 = vmul.f32 %v253, %v324
      %v355 = vmul.f32 %v254, %v324
      %v356 = vmul.f32 %v255, %v324
      %v357 = vmul.f32 %v256, %v324
      %358 = vst [vmem:[%s224] sm:$0xff] %v326
      %359 = vst [vmem:[%s224 + $0x8] sm:$0xff] %v327
      %360 = vst [vmem:[%s224 + $0x10] sm:$0xff] %v328
      %361 = vst [vmem:[%s224 + $0x18] sm:$0xff] %v329
      %362 = vst [vmem:[%s224 + $0x20] sm:$0xff] %v330
      %363 = vst [vmem:[%s224 + $0x28] sm:$0xff] %v331
      %364 = vst [vmem:[%s224 + $0x30] sm:$0xff] %v332
      %365 = vst [vmem:[%s224 + $0x38] sm:$0xff] %v333
      %366 = vst [vmem:[%s224 + $0x40] sm:$0xff] %v334
      %367 = vst [vmem:[%s224 + $0x48] sm:$0xff] %v335
      %368 = vst [vmem:[%s224 + $0x50] sm:$0xff] %v336
      %369 = vst [vmem:[%s224 + $0x58] sm:$0xff] %v337
      %370 = vst [vmem:[%s224 + $0x60] sm:$0xff] %v338
      %371 = vst [vmem:[%s224 + $0x68] sm:$0xff] %v339
      %372 = vst [vmem:[%s224 + $0x70] sm:$0xff] %v340
      %373 = vst [vmem:[%s224 + $0x78] sm:$0xff] %v341
      %374 = vst [vmem:[%s224 + $0x80] sm:$0xff] %v342
      %375 = vst [vmem:[%s224 + $0x88] sm:$0xff] %v343
      %376 = vst [vmem:[%s224 + $0x90] sm:$0xff] %v344
      %377 = vst [vmem:[%s224 + $0x98] sm:$0xff] %v345
      %378 = vst [vmem:[%s224 + $0xa0] sm:$0xff] %v346
      %379 = vst [vmem:[%s224 + $0xa8] sm:$0xff] %v347
      %380 = vst [vmem:[%s224 + $0xb0] sm:$0xff] %v348
      %381 = vst [vmem:[%s224 + $0xb8] sm:$0xff] %v349
      %382 = vst [vmem:[%s224 + $0xc0] sm:$0xff] %v350
      %383 = vst [vmem:[%s224 + $0xc8] sm:$0xff] %v351
      %384 = vst [vmem:[%s224 + $0xd0] sm:$0xff] %v352
      %385 = vst [vmem:[%s224 + $0xd8] sm:$0xff] %v353
      %386 = vst [vmem:[%s224 + $0xe0] sm:$0xff] %v354
      %387 = vst [vmem:[%s224 + $0xe8] sm:$0xff] %v355
      %388 = vst [vmem:[%s224 + $0xf0] sm:$0xff] %v356
      %389 = vst [vmem:[%s224 + $0xf8] sm:$0xff] %v357
      %p390 = scmp.lt.s32.totalorder %s16, 1
      %s391 = scalar_select %p390, %s16, 1
      %s392 = smul.addr %s391, 32
      %s393 = smul.addr %s392, 8
      %s394 = scalar_lea.vmem %s5, %s393
      // Predicated region
      $region41: #{se_block_forward.1} parent=39 // pred_check
        %p395 = pneg %p144
      $region42: #{se_block_forward.1} parent=39 // pred_check_branch
        %397 = sbr.rel (%p395) target = $region44
      $region43: #{se_block_forward.1} parent=39 // pred_region
        _
      $region44: #{se_block_forward.1} parent=39 // pred_fallthru
        _
    $region40: #{se_block_forward.1} parent=5 // pred_fallthru
      _
    %p398 = scmp.le.s32.totalorder 2, %s11
    // Predicated region
    $region45: #{se_block_forward.1} parent=5 // pred_check
      %p399 = pneg %p398
    $region46: #{se_block_forward.1} parent=5 // pred_check_branch
      %401 = sbr.rel (%p399) target = $region48
    $region47: #{se_block_forward.1} parent=5 // pred_region
      %s402 = ssub.s32 %s11, 2
      // Predicated region
      $region49: #{se_block_forward.1} parent=47 // pred_check
        %p403 = pneg %p150
      $region50: #{se_block_forward.1} parent=47 // pred_check_branch
        %405 = sbr.rel (%p403) target = $region52
      $region51: #{se_block_forward.1} parent=47 // pred_region
        %p406 = scmp.lt.s32.totalorder %s17, 1
        %s407 = scalar_select %p406, %s17, 1
        %s408 = smul.addr %s407, 32
        %s409 = smul.addr %s408, 8
        %s410 = scalar_lea.vmem %s5, %s409
      $region52: #{se_block_forward.1} parent=47 // pred_fallthru
        _
    $region48: #{se_block_forward.1} parent=5 // pred_fallthru
      _
  $region6: #{se_block_forward.1} parent=0 // loop_footer
    %s15 = sadd.s32 1, %s11
  $region7: #{se_block_forward.1} parent=0 // loop_footer_branch
    %10 = sbr.rel target = $region3
  $region8: #{se_block_forward.1} parent=0 // loop_exit
    _

</llo_original>
